<compile_context>
chip_gen: v7x
topology: tpu7x:2x2x1
jax: 0.10.0
libtpu: 0.0.40
codegen_flags: <defaults>
</compile_context>

<pallas_src>
import functools

import jax
import jax.numpy as jnp
from jax.experimental import pallas as pl
from jax.experimental.pallas import tpu as pltpu  # noqa: F401  (TPU backend)

EPS = 1e-5
KK = 9  # 3x3 kernel, flattened


# ---------------- parameter slab layout ----------------

def _up8(v):
    return (v + 7) // 8 * 8


def _slab_layout(cin, cout):
    """Row offsets of each parameter block inside the packed (rows, width) slab.

    Blocks (row-padded to multiples of 8 so every in-kernel load starts on a
    sublane-tile boundary):
      w1t : (Cin,  Cout)  conv1 weight, transposed  -> column o = w1[o, :]
      w2p : (Cout*Cout, 9) conv2 weight permuted to (i, o, p), rows i*Cout+o
      w3  : (C4,   Cout)  conv3 weight (natural OI) -> column o = w3[:, o]
      bn  : (Cout, 8)     columns = b1, g1, be1, b2, g2, be2, g3, be3
      b3  : (C4,   1)     conv3 bias
    """
    c4 = 4 * cout
    r_w1 = 0
    r_w2 = r_w1 + _up8(cin)
    r_w3 = r_w2 + _up8(cout * cout)
    r_bn = r_w3 + _up8(c4)
    r_b3 = r_bn + _up8(cout)
    rows = r_b3 + _up8(c4)
    width = max(cout, KK, 8)
    return dict(r_w1=r_w1, r_w2=r_w2, r_w3=r_w3, r_bn=r_bn, r_b3=r_b3,
                rows=rows, width=width)


def pack_params(params):
    """Pack all weights/biases/BN params into ONE f32 slab (call once, outside jit)."""
    cout, cin = params["w1"].shape[0], params["w1"].shape[1]
    c4 = 4 * cout
    assert params["w2"].shape == (cout, cout, 3, 3)
    assert params["w3"].shape[0] == c4
    L = _slab_layout(cin, cout)

    w1t = params["w1"].reshape(cout, cin).T                      # (Cin, Cout)
    w2p = params["w2"].reshape(cout, cout, KK).transpose(1, 0, 2).reshape(cout * cout, KK)
    w3m = params["w3"].reshape(c4, cout)                         # (C4, Cout)
    bnm = jnp.stack([params[k] for k in
                     ("b1", "g1", "be1", "b2", "g2", "be2", "g3", "be3")],
                    axis=1)                                      # (Cout, 8)
    b3c = params["b3"].reshape(c4, 1)

    slab = jnp.zeros((L["rows"], L["width"]), jnp.float32)
    slab = slab.at[L["r_w1"]:L["r_w1"] + cin, :cout].set(w1t.astype(jnp.float32))
    slab = slab.at[L["r_w2"]:L["r_w2"] + cout * cout, :KK].set(w2p.astype(jnp.float32))
    slab = slab.at[L["r_w3"]:L["r_w3"] + c4, :cout].set(w3m.astype(jnp.float32))
    slab = slab.at[L["r_bn"]:L["r_bn"] + cout, :8].set(bnm.astype(jnp.float32))
    slab = slab.at[L["r_b3"]:L["r_b3"] + c4, :1].set(b3c.astype(jnp.float32))
    return slab


# ---------------- fused kernel ----------------

def _bn_train(y, gamma, beta, count):
    """BatchNorm2d (training mode) on a (N, C, S) value; stats over axes (0, 2).

    Two-pass biased variance (robust for tiny batches), clamped at 0, folded
    into a single (y - mean) * scale + beta; rsqrt goes to the EUP.
    gamma / beta are (C, 1) column vectors (channels on sublanes).
    """
    inv_n = 1.0 / float(count)
    mean = jnp.sum(jnp.sum(y, axis=2, keepdims=True), axis=0, keepdims=True) * inv_n
    d = y - mean
    var = jnp.sum(jnp.sum(d * d, axis=2, keepdims=True), axis=0, keepdims=True) * inv_n
    scale = gamma * jax.lax.rsqrt(jnp.maximum(var, 0.0) + EPS)
    return d * scale + beta


def _fused_bottleneck_kernel(x_ref, p_ref, o_ref, *, cin, cout):
    """conv1+bn1+relu -> conv2+bn2+relu -> bn3+conv3 -> residual add + relu.

    Layout: channels on sublanes, flattened spatial (h*W + w) on lanes.  All
    weights come out of one packed slab via static ref slices; every
    intermediate stays in VMEM/vregs.
    """
    n, _, s = x_ref.shape
    assert s == KK  # 3x3 spatial: flattened spatial axis == flattened 3x3 patch
    c4 = 4 * cout
    L = _slab_layout(cin, cout)
    r_w1, r_w2, r_w3, r_bn, r_b3 = (L["r_w1"], L["r_w2"], L["r_w3"],
                                    L["r_bn"], L["r_b3"])

    def bn_col(j):  # (Cout, 1): one per-channel parameter column of the BN block
        return p_ref[r_bn:r_bn + cout, j:j + 1]

    xk = x_ref[...]                                              # (N, Cin, S)

    # ---- conv1 (1x1, Cin -> Cout) + bn1 + ReLU --------------------------
    # Unrolled over the Cout output channels: tiny VPU multiply + one small
    # sublane reduce each; no (N, Cout, Cin, S) materialization.
    cols = []
    for o in range(cout):
        w1_o = p_ref[r_w1:r_w1 + cin, o:o + 1]                   # (Cin, 1)
        cols.append(jnp.sum(w1_o[None] * xk, axis=1, keepdims=True))  # (N,1,S)
    y1 = jnp.concatenate(cols, axis=1) + bn_col(0)               # + b1 -> (N,Cout,S)
    y1 = jnp.maximum(_bn_train(y1, bn_col(1), bn_col(2), n * s), 0.0)

    # ---- conv2 (3x3, stride 2, valid -> single output pixel) + bn2 + ReLU
    # The one output pixel sees the whole 3x3 grid, so the flattened spatial
    # axis IS the patch axis.  Unrolled VPU accumulation over the Cout input
    # channels, then one lane reduce over the 9 taps.
    acc2 = jnp.zeros((n, cout, KK), jnp.float32)
    for i in range(cout):
        w2_i = p_ref[r_w2 + i * cout:r_w2 + (i + 1) * cout, 0:KK]  # (Cout, KK)
        acc2 = acc2 + w2_i[None] * y1[:, i:i + 1, :]
    z = jnp.sum(acc2, axis=2, keepdims=True) + bn_col(3)         # + b2 -> (N,Cout,1)
    z = jnp.maximum(_bn_train(z, bn_col(4), bn_col(5), n), 0.0)
    # ---- bn3 (applied before conv3, as in the module) --------------------
    z = _bn_train(z, bn_col(6), bn_col(7), n)

    # ---- conv3 (1x1, Cout -> 4*Cout): unrolled VPU accumulation ----------
    y3 = jnp.zeros((n, c4, 1), jnp.float32)
    for o in range(cout):
        w3_o = p_ref[r_w3:r_w3 + c4, o:o + 1]                    # (C4, 1)
        y3 = y3 + w3_o[None] * z[:, o:o + 1, :]
    y3 = y3 + p_ref[r_b3:r_b3 + c4, 0:1]                         # + b3 -> (N,C4,1)

    # ---- residual (1x1 output broadcasts over the 3x3 grid) + ReLU -------
    # Written directly in (N, C, H*W) i.e. NCHW order -- no output transpose.
    o_ref[...] = jnp.maximum(xk + y3, 0.0)


# ---------------- wrapper ----------------

def bottleneck_block(x, packed_params, *, cout):
    """Forward pass of BottleNeckBlock on an NCHW input via one fused Pallas kernel.

    `packed_params` is the slab from `pack_params` (built once outside the hot
    path); the jitted forward only reshapes x.
    """
    N, Cin, H, W = x.shape
    c4 = 4 * cout
    # forward() is only well-defined when conv2 (3x3, stride 2, valid) yields a
    # 1x1 output covering the full 3x3 grid and the residual broadcast is clean.
    assert H == 3 and W == 3 and Cin == c4, \
        "BottleNeckBlock.forward requires 3x3 spatial input and in_channels == 4*out_channels"
    S = H * W
    L = _slab_layout(Cin, cout)
    assert packed_params.shape == (L["rows"], L["width"])

    # Only FREE contiguous reshapes below -- no transposes, no layout shuffles.
    x3 = x.reshape(N, Cin, S).astype(jnp.float32)                # NCHW -> (N, C, HW)

    out = pl.pallas_call(
        functools.partial(_fused_bottleneck_kernel, cin=Cin, cout=cout),
        out_shape=jax.ShapeDtypeStruct((N, c4, S), jnp.float32),
        # x3 and the output have identical shape/dtype (Cin == 4*Cout): reuse
        # the buffer instead of allocating a second HBM output.
        input_output_aliases={0: 0},
        # No grid / no BlockSpecs: single block, both operands fully resident
        # in VMEM (whole problem ~2 KiB), one launch, one HBM writeback.
    )(x3, packed_params)

    return out.reshape(N, c4, H, W)                              # free (contiguous)


# ---------------- deterministic parameter init ----------------

def init_params(key, in_channels, out_channels):
    c4 = out_channels * 4
    ks = jax.random.split(key, 6)

    def u(k, shape, fan_in):
        bound = 1.0 / jnp.sqrt(float(fan_in))
        return jax.random.uniform(k, shape, jnp.float32, -bound, bound)

    return dict(
        w1=u(ks[0], (out_channels, in_channels, 1, 1), in_channels),
        b1=u(ks[1], (out_channels,), in_channels),
        w2=u(ks[2], (out_channels, out_channels, 3, 3), out_channels * 9),
        b2=u(ks[3], (out_channels,), out_channels * 9),
        w3=u(ks[4], (c4, out_channels, 1, 1), out_channels),
        b3=u(ks[5], (c4,), out_channels),
        g1=jnp.ones((out_channels,), jnp.float32),
        be1=jnp.zeros((out_channels,), jnp.float32),
        g2=jnp.ones((out_channels,), jnp.float32),
        be2=jnp.zeros((out_channels,), jnp.float32),
        g3=jnp.ones((out_channels,), jnp.float32),
        be3=jnp.zeros((out_channels,), jnp.float32),
    )


# ---------------- pure-JAX reference (for validation) ----------------

def reference_forward(x, params):
    def conv(v, w, b, stride):
        out = jax.lax.conv_general_dilated(
            v, w, (stride, stride), "VALID",
            dimension_numbers=("NCHW", "OIHW", "NCHW"))
        return out + b.reshape(1, -1, 1, 1)

    def bn(v, g, bb):
        mean = jnp.mean(v, axis=(0, 2, 3), keepdims=True)
        var = jnp.mean((v - mean) ** 2, axis=(0, 2, 3), keepdims=True)
        return (v - mean) / jnp.sqrt(var + EPS) * g.reshape(1, -1, 1, 1) + bb.reshape(1, -1, 1, 1)

    relu = lambda v: jnp.maximum(v, 0.0)
    y = relu(bn(conv(x, params["w1"], params["b1"], 1), params["g1"], params["be1"]))
    y = relu(bn(conv(y, params["w2"], params["b2"], 2), params["g2"], params["be2"]))
    y = bn(y, params["g3"], params["be3"])
    y = conv(y, params["w3"], params["b3"], 1)
    return relu(y + x)


if __name__ == "__main__":
    key = jax.random.PRNGKey(0)
    k_x, k_p = jax.random.split(key)

    # Shapes consistent with the module's forward: in_channels == 4*out_channels,
    # spatial 3x3 so conv2 (3x3, stride 2, no pad) yields 1x1.
    in_channels, out_channels = 16, 4
    N, H, W = 2, 3, 3

    x = jax.random.normal(k_x, (N, in_channels, H, W), jnp.float32)
    params = init_params(k_p, in_channels, out_channels)
    packed = pack_params(params)     # one-time packing, outside the jitted hot path

    fwd = jax.jit(functools.partial(bottleneck_block, cout=out_channels))
    out = jax.block_until_ready(fwd(x, packed))

    ref = reference_forward(x, params)
    assert out.shape == (N, in_channels, H, W)
    err = float(jnp.max(jnp.abs(out - ref)))
    # Two-pass clamped variance keeps this well below 1e-4 in practice; the
    # folded BN scale/shift with 2-sample batch statistics can amplify f32
    # rounding, so keep a safe (still tight) tolerance.
    assert jnp.allclose(out, ref, atol=1e-3, rtol=1e-3), err
    print("KERNEL_OK")
</pallas_src>

<mosaic_0001>
module attributes {stable_mosaic.version = 11 : i64} {
  func.func @_fused_bottleneck_kernel(%arg0: memref<2x16x9xf32, #tpu.memory_space<vmem>>, %arg1: memref<72x9xf32, #tpu.memory_space<vmem>>, %arg2: memref<2x16x9xf32, #tpu.memory_space<vmem>>) attributes {dimension_semantics = [], scalar_prefetch = 0 : i64, scratch_operands = 0 : i64, tpu.core_type = #tpu.core_type<tc>} {
    %c0 = arith.constant 0 : index
    %c0_0 = arith.constant 0 : index
    %c0_1 = arith.constant 0 : index
    %0 = vector.load %arg0[%c0, %c0_0, %c0_1] : memref<2x16x9xf32, #tpu.memory_space<vmem>>, vector<2x16x9xf32>
    %c0_2 = arith.constant 0 : index
    %c0_3 = arith.constant 0 : index
    %1 = vector.load %arg1[%c0_2, %c0_3] : memref<72x9xf32, #tpu.memory_space<vmem>>, vector<16x1xf32>
    %2 = vector.shape_cast %1 : vector<16x1xf32> to vector<1x16x1xf32>
    %3 = vector.broadcast %2 : vector<1x16x1xf32> to vector<2x16x9xf32>
    %4 = arith.mulf %3, %0 : vector<2x16x9xf32>
    %cst = arith.constant dense<0.000000e+00> : vector<2x9xf32>
    %5 = vector.multi_reduction <add>, %4, %cst [1] : vector<2x16x9xf32> to vector<2x9xf32>
    %6 = vector.shape_cast %5 : vector<2x9xf32> to vector<2x1x9xf32>
    %c0_4 = arith.constant 0 : index
    %c1 = arith.constant 1 : index
    %7 = vector.load %arg1[%c0_4, %c1] : memref<72x9xf32, #tpu.memory_space<vmem>>, vector<16x1xf32>
    %8 = vector.shape_cast %7 : vector<16x1xf32> to vector<1x16x1xf32>
    %9 = vector.broadcast %8 : vector<1x16x1xf32> to vector<2x16x9xf32>
    %10 = arith.mulf %9, %0 : vector<2x16x9xf32>
    %cst_5 = arith.constant dense<0.000000e+00> : vector<2x9xf32>
    %11 = vector.multi_reduction <add>, %10, %cst_5 [1] : vector<2x16x9xf32> to vector<2x9xf32>
    %12 = vector.shape_cast %11 : vector<2x9xf32> to vector<2x1x9xf32>
    %c0_6 = arith.constant 0 : index
    %c2 = arith.constant 2 : index
    %13 = vector.load %arg1[%c0_6, %c2] : memref<72x9xf32, #tpu.memory_space<vmem>>, vector<16x1xf32>
    %14 = vector.shape_cast %13 : vector<16x1xf32> to vector<1x16x1xf32>
    %15 = vector.broadcast %14 : vector<1x16x1xf32> to vector<2x16x9xf32>
    %16 = arith.mulf %15, %0 : vector<2x16x9xf32>
    %cst_7 = arith.constant dense<0.000000e+00> : vector<2x9xf32>
    %17 = vector.multi_reduction <add>, %16, %cst_7 [1] : vector<2x16x9xf32> to vector<2x9xf32>
    %18 = vector.shape_cast %17 : vector<2x9xf32> to vector<2x1x9xf32>
    %c0_8 = arith.constant 0 : index
    %c3 = arith.constant 3 : index
    %19 = vector.load %arg1[%c0_8, %c3] : memref<72x9xf32, #tpu.memory_space<vmem>>, vector<16x1xf32>
    %20 = vector.shape_cast %19 : vector<16x1xf32> to vector<1x16x1xf32>
    %21 = vector.broadcast %20 : vector<1x16x1xf32> to vector<2x16x9xf32>
    %22 = arith.mulf %21, %0 : vector<2x16x9xf32>
    %cst_9 = arith.constant dense<0.000000e+00> : vector<2x9xf32>
    %23 = vector.multi_reduction <add>, %22, %cst_9 [1] : vector<2x16x9xf32> to vector<2x9xf32>
    %24 = vector.shape_cast %23 : vector<2x9xf32> to vector<2x1x9xf32>
    %25 = tpu.concatenate %6, %12, %18, %24 in 1 : vector<2x1x9xf32>, vector<2x1x9xf32>, vector<2x1x9xf32>, vector<2x1x9xf32> -> vector<2x4x9xf32>
    %c48 = arith.constant 48 : index
    %c0_10 = arith.constant 0 : index
    %26 = vector.load %arg1[%c48, %c0_10] : memref<72x9xf32, #tpu.memory_space<vmem>>, vector<4x1xf32>
    %27 = vector.shape_cast %26 : vector<4x1xf32> to vector<1x4x1xf32>
    %28 = vector.broadcast %27 : vector<1x4x1xf32> to vector<2x4x9xf32>
    %29 = arith.addf %25, %28 : vector<2x4x9xf32>
    %c48_11 = arith.constant 48 : index
    %c1_12 = arith.constant 1 : index
    %30 = vector.load %arg1[%c48_11, %c1_12] : memref<72x9xf32, #tpu.memory_space<vmem>>, vector<4x1xf32>
    %c48_13 = arith.constant 48 : index
    %c2_14 = arith.constant 2 : index
    %31 = vector.load %arg1[%c48_13, %c2_14] : memref<72x9xf32, #tpu.memory_space<vmem>>, vector<4x1xf32>
    %cst_15 = arith.constant dense<0.000000e+00> : vector<2x4xf32>
    %32 = vector.multi_reduction <add>, %29, %cst_15 [2] : vector<2x4x9xf32> to vector<2x4xf32>
    %33 = vector.shape_cast %32 : vector<2x4xf32> to vector<2x4x1xf32>
    %cst_16 = arith.constant dense<0.000000e+00> : vector<4x1xf32>
    %34 = vector.multi_reduction <add>, %33, %cst_16 [0] : vector<2x4x1xf32> to vector<4x1xf32>
    %35 = vector.shape_cast %34 : vector<4x1xf32> to vector<1x4x1xf32>
    %cst_17 = arith.constant 0.055555556 : f32
    %36 = vector.broadcast %cst_17 : f32 to vector<1x4x1xf32>
    %37 = arith.mulf %35, %36 : vector<1x4x1xf32>
    %38 = vector.broadcast %37 : vector<1x4x1xf32> to vector<2x4x9xf32>
    %39 = arith.subf %29, %38 : vector<2x4x9xf32>
    %40 = arith.mulf %39, %39 : vector<2x4x9xf32>
    %cst_18 = arith.constant dense<0.000000e+00> : vector<2x4xf32>
    %41 = vector.multi_reduction <add>, %40, %cst_18 [2] : vector<2x4x9xf32> to vector<2x4xf32>
    %42 = vector.shape_cast %41 : vector<2x4xf32> to vector<2x4x1xf32>
    %cst_19 = arith.constant dense<0.000000e+00> : vector<4x1xf32>
    %43 = vector.multi_reduction <add>, %42, %cst_19 [0] : vector<2x4x1xf32> to vector<4x1xf32>
    %44 = vector.shape_cast %43 : vector<4x1xf32> to vector<1x4x1xf32>
    %cst_20 = arith.constant 0.055555556 : f32
    %45 = vector.broadcast %cst_20 : f32 to vector<1x4x1xf32>
    %46 = arith.mulf %44, %45 : vector<1x4x1xf32>
    %cst_21 = arith.constant 0.000000e+00 : f32
    %47 = vector.broadcast %cst_21 : f32 to vector<1x4x1xf32>
    %48 = arith.maximumf %46, %47 : vector<1x4x1xf32>
    %cst_22 = arith.constant 9.99999974E-6 : f32
    %49 = vector.broadcast %cst_22 : f32 to vector<1x4x1xf32>
    %50 = arith.addf %48, %49 : vector<1x4x1xf32>
    %51 = math.rsqrt %50 : vector<1x4x1xf32>
    %52 = vector.shape_cast %30 : vector<4x1xf32> to vector<1x4x1xf32>
    %53 = arith.mulf %52, %51 : vector<1x4x1xf32>
    %54 = vector.broadcast %53 : vector<1x4x1xf32> to vector<2x4x9xf32>
    %55 = arith.mulf %39, %54 : vector<2x4x9xf32>
    %56 = vector.shape_cast %31 : vector<4x1xf32> to vector<1x4x1xf32>
    %57 = vector.broadcast %56 : vector<1x4x1xf32> to vector<2x4x9xf32>
    %58 = arith.addf %55, %57 : vector<2x4x9xf32>
    %cst_23 = arith.constant 0.000000e+00 : f32
    %59 = vector.broadcast %cst_23 : f32 to vector<2x4x9xf32>
    %60 = arith.maximumf %58, %59 : vector<2x4x9xf32>
    %cst_24 = arith.constant 0.000000e+00 : f32
    %61 = vector.broadcast %cst_24 : f32 to vector<2x4x9xf32>
    %c16 = arith.constant 16 : index
    %c0_25 = arith.constant 0 : index
    %62 = vector.load %arg1[%c16, %c0_25] : memref<72x9xf32, #tpu.memory_space<vmem>>, vector<4x9xf32>
    %63 = vector.shape_cast %62 : vector<4x9xf32> to vector<1x4x9xf32>
    %64 = vector.extract_strided_slice %60 {offsets = [0, 0, 0], sizes = [2, 1, 9], strides = [1, 1, 1]} : vector<2x4x9xf32> to vector<2x1x9xf32>
    %65 = vector.broadcast %63 : vector<1x4x9xf32> to vector<2x4x9xf32>
    %66 = vector.broadcast %64 : vector<2x1x9xf32> to vector<2x4x9xf32>
    %67 = arith.mulf %65, %66 : vector<2x4x9xf32>
    %68 = arith.addf %61, %67 : vector<2x4x9xf32>
    %c20 = arith.constant 20 : index
    %c0_26 = arith.constant 0 : index
    %69 = vector.load %arg1[%c20, %c0_26] : memref<72x9xf32, #tpu.memory_space<vmem>>, vector<4x9xf32>
    %70 = vector.shape_cast %69 : vector<4x9xf32> to vector<1x4x9xf32>
    %71 = vector.extract_strided_slice %60 {offsets = [0, 1, 0], sizes = [2, 1, 9], strides = [1, 1, 1]} : vector<2x4x9xf32> to vector<2x1x9xf32>
    %72 = vector.broadcast %70 : vector<1x4x9xf32> to vector<2x4x9xf32>
    %73 = vector.broadcast %71 : vector<2x1x9xf32> to vector<2x4x9xf32>
    %74 = arith.mulf %72, %73 : vector<2x4x9xf32>
    %75 = arith.addf %68, %74 : vector<2x4x9xf32>
    %c24 = arith.constant 24 : index
    %c0_27 = arith.constant 0 : index
    %76 = vector.load %arg1[%c24, %c0_27] : memref<72x9xf32, #tpu.memory_space<vmem>>, vector<4x9xf32>
    %77 = vector.shape_cast %76 : vector<4x9xf32> to vector<1x4x9xf32>
    %78 = vector.extract_strided_slice %60 {offsets = [0, 2, 0], sizes = [2, 1, 9], strides = [1, 1, 1]} : vector<2x4x9xf32> to vector<2x1x9xf32>
    %79 = vector.broadcast %77 : vector<1x4x9xf32> to vector<2x4x9xf32>
    %80 = vector.broadcast %78 : vector<2x1x9xf32> to vector<2x4x9xf32>
    %81 = arith.mulf %79, %80 : vector<2x4x9xf32>
    %82 = arith.addf %75, %81 : vector<2x4x9xf32>
    %c28 = arith.constant 28 : index
    %c0_28 = arith.constant 0 : index
    %83 = vector.load %arg1[%c28, %c0_28] : memref<72x9xf32, #tpu.memory_space<vmem>>, vector<4x9xf32>
    %84 = vector.shape_cast %83 : vector<4x9xf32> to vector<1x4x9xf32>
    %85 = vector.extract_strided_slice %60 {offsets = [0, 3, 0], sizes = [2, 1, 9], strides = [1, 1, 1]} : vector<2x4x9xf32> to vector<2x1x9xf32>
    %86 = vector.broadcast %84 : vector<1x4x9xf32> to vector<2x4x9xf32>
    %87 = vector.broadcast %85 : vector<2x1x9xf32> to vector<2x4x9xf32>
    %88 = arith.mulf %86, %87 : vector<2x4x9xf32>
    %89 = arith.addf %82, %88 : vector<2x4x9xf32>
    %cst_29 = arith.constant dense<0.000000e+00> : vector<2x4xf32>
    %90 = vector.multi_reduction <add>, %89, %cst_29 [2] : vector<2x4x9xf32> to vector<2x4xf32>
    %91 = vector.shape_cast %90 : vector<2x4xf32> to vector<2x4x1xf32>
    %c48_30 = arith.constant 48 : index
    %c3_31 = arith.constant 3 : index
    %92 = vector.load %arg1[%c48_30, %c3_31] : memref<72x9xf32, #tpu.memory_space<vmem>>, vector<4x1xf32>
    %93 = vector.shape_cast %92 : vector<4x1xf32> to vector<1x4x1xf32>
    %94 = vector.broadcast %93 : vector<1x4x1xf32> to vector<2x4x1xf32>
    %95 = arith.addf %91, %94 : vector<2x4x1xf32>
    %c48_32 = arith.constant 48 : index
    %c4 = arith.constant 4 : index
    %96 = vector.load %arg1[%c48_32, %c4] : memref<72x9xf32, #tpu.memory_space<vmem>>, vector<4x1xf32>
    %c48_33 = arith.constant 48 : index
    %c5 = arith.constant 5 : index
    %97 = vector.load %arg1[%c48_33, %c5] : memref<72x9xf32, #tpu.memory_space<vmem>>, vector<4x1xf32>
    %cst_34 = arith.constant dense<0.000000e+00> : vector<2x4xf32>
    %98 = vector.multi_reduction <add>, %95, %cst_34 [2] : vector<2x4x1xf32> to vector<2x4xf32>
    %99 = vector.shape_cast %98 : vector<2x4xf32> to vector<2x4x1xf32>
    %cst_35 = arith.constant dense<0.000000e+00> : vector<4x1xf32>
    %100 = vector.multi_reduction <add>, %99, %cst_35 [0] : vector<2x4x1xf32> to vector<4x1xf32>
    %101 = vector.shape_cast %100 : vector<4x1xf32> to vector<1x4x1xf32>
    %cst_36 = arith.constant 5.000000e-01 : f32
    %102 = vector.broadcast %cst_36 : f32 to vector<1x4x1xf32>
    %103 = arith.mulf %101, %102 : vector<1x4x1xf32>
    %104 = vector.broadcast %103 : vector<1x4x1xf32> to vector<2x4x1xf32>
    %105 = arith.subf %95, %104 : vector<2x4x1xf32>
    %106 = arith.mulf %105, %105 : vector<2x4x1xf32>
    %cst_37 = arith.constant dense<0.000000e+00> : vector<2x4xf32>
    %107 = vector.multi_reduction <add>, %106, %cst_37 [2] : vector<2x4x1xf32> to vector<2x4xf32>
    %108 = vector.shape_cast %107 : vector<2x4xf32> to vector<2x4x1xf32>
    %cst_38 = arith.constant dense<0.000000e+00> : vector<4x1xf32>
    %109 = vector.multi_reduction <add>, %108, %cst_38 [0] : vector<2x4x1xf32> to vector<4x1xf32>
    %110 = vector.shape_cast %109 : vector<4x1xf32> to vector<1x4x1xf32>
    %cst_39 = arith.constant 5.000000e-01 : f32
    %111 = vector.broadcast %cst_39 : f32 to vector<1x4x1xf32>
    %112 = arith.mulf %110, %111 : vector<1x4x1xf32>
    %cst_40 = arith.constant 0.000000e+00 : f32
    %113 = vector.broadcast %cst_40 : f32 to vector<1x4x1xf32>
    %114 = arith.maximumf %112, %113 : vector<1x4x1xf32>
    %cst_41 = arith.constant 9.99999974E-6 : f32
    %115 = vector.broadcast %cst_41 : f32 to vector<1x4x1xf32>
    %116 = arith.addf %114, %115 : vector<1x4x1xf32>
    %117 = math.rsqrt %116 : vector<1x4x1xf32>
    %118 = vector.shape_cast %96 : vector<4x1xf32> to vector<1x4x1xf32>
    %119 = arith.mulf %118, %117 : vector<1x4x1xf32>
    %120 = vector.broadcast %119 : vector<1x4x1xf32> to vector<2x4x1xf32>
    %121 = arith.mulf %105, %120 : vector<2x4x1xf32>
    %122 = vector.shape_cast %97 : vector<4x1xf32> to vector<1x4x1xf32>
    %123 = vector.broadcast %122 : vector<1x4x1xf32> to vector<2x4x1xf32>
    %124 = arith.addf %121, %123 : vector<2x4x1xf32>
    %cst_42 = arith.constant 0.000000e+00 : f32
    %125 = vector.broadcast %cst_42 : f32 to vector<2x4x1xf32>
    %126 = arith.maximumf %124, %125 : vector<2x4x1xf32>
    %c48_43 = arith.constant 48 : index
    %c6 = arith.constant 6 : index
    %127 = vector.load %arg1[%c48_43, %c6] : memref<72x9xf32, #tpu.memory_space<vmem>>, vector<4x1xf32>
    %c48_44 = arith.constant 48 : index
    %c7 = arith.constant 7 : index
    %128 = vector.load %arg1[%c48_44, %c7] : memref<72x9xf32, #tpu.memory_space<vmem>>, vector<4x1xf32>
    %cst_45 = arith.constant dense<0.000000e+00> : vector<2x4xf32>
    %129 = vector.multi_reduction <add>, %126, %cst_45 [2] : vector<2x4x1xf32> to vector<2x4xf32>
    %130 = vector.shape_cast %129 : vector<2x4xf32> to vector<2x4x1xf32>
    %cst_46 = arith.constant dense<0.000000e+00> : vector<4x1xf32>
    %131 = vector.multi_reduction <add>, %130, %cst_46 [0] : vector<2x4x1xf32> to vector<4x1xf32>
    %132 = vector.shape_cast %131 : vector<4x1xf32> to vector<1x4x1xf32>
    %cst_47 = arith.constant 5.000000e-01 : f32
    %133 = vector.broadcast %cst_47 : f32 to vector<1x4x1xf32>
    %134 = arith.mulf %132, %133 : vector<1x4x1xf32>
    %135 = vector.broadcast %134 : vector<1x4x1xf32> to vector<2x4x1xf32>
    %136 = arith.subf %126, %135 : vector<2x4x1xf32>
    %137 = arith.mulf %136, %136 : vector<2x4x1xf32>
    %cst_48 = arith.constant dense<0.000000e+00> : vector<2x4xf32>
    %138 = vector.multi_reduction <add>, %137, %cst_48 [2] : vector<2x4x1xf32> to vector<2x4xf32>
    %139 = vector.shape_cast %138 : vector<2x4xf32> to vector<2x4x1xf32>
    %cst_49 = arith.constant dense<0.000000e+00> : vector<4x1xf32>
    %140 = vector.multi_reduction <add>, %139, %cst_49 [0] : vector<2x4x1xf32> to vector<4x1xf32>
    %141 = vector.shape_cast %140 : vector<4x1xf32> to vector<1x4x1xf32>
    %cst_50 = arith.constant 5.000000e-01 : f32
    %142 = vector.broadcast %cst_50 : f32 to vector<1x4x1xf32>
    %143 = arith.mulf %141, %142 : vector<1x4x1xf32>
    %cst_51 = arith.constant 0.000000e+00 : f32
    %144 = vector.broadcast %cst_51 : f32 to vector<1x4x1xf32>
    %145 = arith.maximumf %143, %144 : vector<1x4x1xf32>
    %cst_52 = arith.constant 9.99999974E-6 : f32
    %146 = vector.broadcast %cst_52 : f32 to vector<1x4x1xf32>
    %147 = arith.addf %145, %146 : vector<1x4x1xf32>
    %148 = math.rsqrt %147 : vector<1x4x1xf32>
    %149 = vector.shape_cast %127 : vector<4x1xf32> to vector<1x4x1xf32>
    %150 = arith.mulf %149, %148 : vector<1x4x1xf32>
    %151 = vector.broadcast %150 : vector<1x4x1xf32> to vector<2x4x1xf32>
    %152 = arith.mulf %136, %151 : vector<2x4x1xf32>
    %153 = vector.shape_cast %128 : vector<4x1xf32> to vector<1x4x1xf32>
    %154 = vector.broadcast %153 : vector<1x4x1xf32> to vector<2x4x1xf32>
    %155 = arith.addf %152, %154 : vector<2x4x1xf32>
    %cst_53 = arith.constant 0.000000e+00 : f32
    %156 = vector.broadcast %cst_53 : f32 to vector<2x16x1xf32>
    %c32 = arith.constant 32 : index
    %c0_54 = arith.constant 0 : index
    %157 = vector.load %arg1[%c32, %c0_54] : memref<72x9xf32, #tpu.memory_space<vmem>>, vector<16x1xf32>
    %158 = vector.shape_cast %157 : vector<16x1xf32> to vector<1x16x1xf32>
    %159 = vector.extract_strided_slice %155 {offsets = [0, 0, 0], sizes = [2, 1, 1], strides = [1, 1, 1]} : vector<2x4x1xf32> to vector<2x1x1xf32>
    %160 = vector.broadcast %158 : vector<1x16x1xf32> to vector<2x16x1xf32>
    %161 = vector.broadcast %159 : vector<2x1x1xf32> to vector<2x16x1xf32>
    %162 = arith.mulf %160, %161 : vector<2x16x1xf32>
    %163 = arith.addf %156, %162 : vector<2x16x1xf32>
    %c32_55 = arith.constant 32 : index
    %c1_56 = arith.constant 1 : index
    %164 = vector.load %arg1[%c32_55, %c1_56] : memref<72x9xf32, #tpu.memory_space<vmem>>, vector<16x1xf32>
    %165 = vector.shape_cast %164 : vector<16x1xf32> to vector<1x16x1xf32>
    %166 = vector.extract_strided_slice %155 {offsets = [0, 1, 0], sizes = [2, 1, 1], strides = [1, 1, 1]} : vector<2x4x1xf32> to vector<2x1x1xf32>
    %167 = vector.broadcast %165 : vector<1x16x1xf32> to vector<2x16x1xf32>
    %168 = vector.broadcast %166 : vector<2x1x1xf32> to vector<2x16x1xf32>
    %169 = arith.mulf %167, %168 : vector<2x16x1xf32>
    %170 = arith.addf %163, %169 : vector<2x16x1xf32>
    %c32_57 = arith.constant 32 : index
    %c2_58 = arith.constant 2 : index
    %171 = vector.load %arg1[%c32_57, %c2_58] : memref<72x9xf32, #tpu.memory_space<vmem>>, vector<16x1xf32>
    %172 = vector.shape_cast %171 : vector<16x1xf32> to vector<1x16x1xf32>
    %173 = vector.extract_strided_slice %155 {offsets = [0, 2, 0], sizes = [2, 1, 1], strides = [1, 1, 1]} : vector<2x4x1xf32> to vector<2x1x1xf32>
    %174 = vector.broadcast %172 : vector<1x16x1xf32> to vector<2x16x1xf32>
    %175 = vector.broadcast %173 : vector<2x1x1xf32> to vector<2x16x1xf32>
    %176 = arith.mulf %174, %175 : vector<2x16x1xf32>
    %177 = arith.addf %170, %176 : vector<2x16x1xf32>
    %c32_59 = arith.constant 32 : index
    %c3_60 = arith.constant 3 : index
    %178 = vector.load %arg1[%c32_59, %c3_60] : memref<72x9xf32, #tpu.memory_space<vmem>>, vector<16x1xf32>
    %179 = vector.shape_cast %178 : vector<16x1xf32> to vector<1x16x1xf32>
    %180 = vector.extract_strided_slice %155 {offsets = [0, 3, 0], sizes = [2, 1, 1], strides = [1, 1, 1]} : vector<2x4x1xf32> to vector<2x1x1xf32>
    %181 = vector.broadcast %179 : vector<1x16x1xf32> to vector<2x16x1xf32>
    %182 = vector.broadcast %180 : vector<2x1x1xf32> to vector<2x16x1xf32>
    %183 = arith.mulf %181, %182 : vector<2x16x1xf32>
    %184 = arith.addf %177, %183 : vector<2x16x1xf32>
    %c56 = arith.constant 56 : index
    %c0_61 = arith.constant 0 : index
    %185 = vector.load %arg1[%c56, %c0_61] : memref<72x9xf32, #tpu.memory_space<vmem>>, vector<16x1xf32>
    %186 = vector.shape_cast %185 : vector<16x1xf32> to vector<1x16x1xf32>
    %187 = vector.broadcast %186 : vector<1x16x1xf32> to vector<2x16x1xf32>
    %188 = arith.addf %184, %187 : vector<2x16x1xf32>
    %189 = vector.broadcast %188 : vector<2x16x1xf32> to vector<2x16x9xf32>
    %190 = arith.addf %0, %189 : vector<2x16x9xf32>
    %cst_62 = arith.constant 0.000000e+00 : f32
    %191 = vector.broadcast %cst_62 : f32 to vector<2x16x9xf32>
    %192 = arith.maximumf %190, %191 : vector<2x16x9xf32>
    %c0_63 = arith.constant 0 : index
    %c0_64 = arith.constant 0 : index
    %c0_65 = arith.constant 0 : index
    %193 = vector.load %arg2[%c0_63, %c0_64, %c0_65] : memref<2x16x9xf32, #tpu.memory_space<vmem>>, vector<2x16x9xf32>
    tpu.vector_store %arg2[%c0_63, %c0_64, %c0_65], %192 {strides = array<i32>} : memref<2x16x9xf32, #tpu.memory_space<vmem>>, vector<2x16x9xf32>,
    return
  }
}

</mosaic_0001>

<llo_original>
// kernel: bottleneck_block.1
$region0: #{bottleneck_block.1}
  #allocation0 [shape = 'u32[]', space=smem, size = 0x4, offset = 0x4, fixed_abs, tag = 'smem constant byte address 0x4 - core index']
  #allocation1 [shape = 'u32[144,128]{1,0:T(1,128)}', space=vmem, size = 0x12000, scoped, tag = 'internal scratch']
  %s0 = inlined_call_operand.vmem [shape: f32[2,16,9], index: 0, kind: input, shape index: {}, may-alias: {0,2}]
  %s1 = inlined_call_operand.vmem [shape: f32[72,9], index: 1, kind: input, shape index: {}]
  %s2 = inlined_call_operand.vmem [shape: f32[2,16,9], index: 2, kind: output, shape index: {}, may-alias: {0,2}]
  %s3 = sld [smem:[#allocation0]]
  $region18: #{bottleneck_block.1} parent=0
    _
  %s5 = ssub.s32 1, %s3
  %s6 = scalar_select 0, %s5, %s3
  // Predicated region
  $region2: #{bottleneck_block.1} parent=0 // pred_check
    _
  $region3: #{bottleneck_block.1} parent=0 // pred_check_branch
    %8 = sbr.rel (0) target = $region5
  $region4: #{bottleneck_block.1} parent=0 // pred_region
    _
  $region5: #{bottleneck_block.1} parent=0 // pred_fallthru
    _
  // Predicated region
  $region6: #{bottleneck_block.1} parent=0 // pred_check
    _
  $region7: #{bottleneck_block.1} parent=0 // pred_check_branch
    %10 = sbr.rel (0) target = $region9
  $region8: #{bottleneck_block.1} parent=0 // pred_region
    _
  $region9: #{bottleneck_block.1} parent=0 // pred_fallthru
    _
  %v11 = vld [vmem:[%s0] sm:$0xff]
  %v12 = vld [vmem:[%s0 + $0x8] sm:$0xff]
  %v13 = vld [vmem:[%s0 + $0x10] sm:$0xff]
  %v14 = vld [vmem:[%s0 + $0x18] sm:$0xff]
  %v15 = vld [vmem:[%s1] sm:$0xff]
  %v16 = vld [vmem:[%s1 + $0x8] sm:$0xff]
  %18 = vset.pattern.permute.xlu0 0
  %19 = vperm.xlu0 %18, %v15
  %v20 = vpop.permute.xlu0 %19
  %23 = vset.pattern.permute.xlu0 0
  %24 = vperm.xlu0 %23, %v16
  %v25 = vpop.permute.xlu0 %24
  %v27 = vmul.f32 %v20, %v11
  %v28 = vmul.f32 %v25, %v12
  %v29 = vmul.f32 %v20, %v13
  %v30 = vmul.f32 %v25, %v14
  %vm31 = vcmask 72704
  %v32 = vsel %vm31, %v27, 0.0
  %v33 = vsel %vm31, %v28, 0.0
  %v34 = vadd.f32 %v32, %v33
  %v35 = vrot.slane %v34, 4
  %v36 = vadd.f32 %v34, %v35
  %v37 = vrot.slane %v36, 2
  %v38 = vadd.f32 %v36, %v37
  %v39 = vrot.slane %v38, 1
  %v40 = vadd.f32 %v38, %v39
  %v41 = vsel %vm31, %v29, 0.0
  %v42 = vsel %vm31, %v30, 0.0
  %v43 = vadd.f32 %v41, %v42
  %v44 = vrot.slane %v43, 4
  %v45 = vadd.f32 %v43, %v44
  %v46 = vrot.slane %v45, 2
  %v47 = vadd.f32 %v45, %v46
  %v48 = vrot.slane %v47, 1
  %v49 = vadd.f32 %v47, %v48
  %50 = vset.pattern.permute.xlu0 1
  %51 = vperm.xlu0 %50, %v15
  %v52 = vpop.permute.xlu0 %51
  %54 = vset.pattern.permute.xlu0 1
  %55 = vperm.xlu0 %54, %v16
  %v56 = vpop.permute.xlu0 %55
  %v58 = vmul.f32 %v52, %v11
  %v59 = vmul.f32 %v56, %v12
  %v60 = vmul.f32 %v52, %v13
  %v61 = vmul.f32 %v56, %v14
  %v62 = vsel %vm31, %v58, 0.0
  %v63 = vsel %vm31, %v59, 0.0
  %v64 = vadd.f32 %v62, %v63
  %v65 = vrot.slane %v64, 4
  %v66 = vadd.f32 %v64, %v65
  %v67 = vrot.slane %v66, 2
  %v68 = vadd.f32 %v66, %v67
  %v69 = vrot.slane %v68, 1
  %v70 = vadd.f32 %v68, %v69
  %v71 = vsel %vm31, %v60, 0.0
  %v72 = vsel %vm31, %v61, 0.0
  %v73 = vadd.f32 %v71, %v72
  %v74 = vrot.slane %v73, 4
  %v75 = vadd.f32 %v73, %v74
  %v76 = vrot.slane %v75, 2
  %v77 = vadd.f32 %v75, %v76
  %v78 = vrot.slane %v77, 1
  %v79 = vadd.f32 %v77, %v78
  %80 = vset.pattern.permute.xlu0 2
  %81 = vperm.xlu0 %80, %v15
  %v82 = vpop.permute.xlu0 %81
  %84 = vset.pattern.permute.xlu0 2
  %85 = vperm.xlu0 %84, %v16
  %v86 = vpop.permute.xlu0 %85
  %v88 = vmul.f32 %v82, %v11
  %v89 = vmul.f32 %v86, %v12
  %v90 = vmul.f32 %v82, %v13
  %v91 = vmul.f32 %v86, %v14
  %v92 = vsel %vm31, %v88, 0.0
  %v93 = vsel %vm31, %v89, 0.0
  %v94 = vadd.f32 %v92, %v93
  %v95 = vrot.slane %v94, 4
  %v96 = vadd.f32 %v94, %v95
  %v97 = vrot.slane %v96, 2
  %v98 = vadd.f32 %v96, %v97
  %v99 = vrot.slane %v98, 1
  %v100 = vadd.f32 %v98, %v99
  %v101 = vsel %vm31, %v90, 0.0
  %v102 = vsel %vm31, %v91, 0.0
  %v103 = vadd.f32 %v101, %v102
  %v104 = vrot.slane %v103, 4
  %v105 = vadd.f32 %v103, %v104
  %v106 = vrot.slane %v105, 2
  %v107 = vadd.f32 %v105, %v106
  %v108 = vrot.slane %v107, 1
  %v109 = vadd.f32 %v107, %v108
  %110 = vset.pattern.permute.xlu0 3
  %111 = vperm.xlu0 %110, %v15
  %v112 = vpop.permute.xlu0 %111
  %114 = vset.pattern.permute.xlu0 3
  %115 = vperm.xlu0 %114, %v16
  %v116 = vpop.permute.xlu0 %115
  %v118 = vmul.f32 %v112, %v11
  %v119 = vmul.f32 %v116, %v12
  %v120 = vmul.f32 %v112, %v13
  %v121 = vmul.f32 %v116, %v14
  %v122 = vsel %vm31, %v118, 0.0
  %v123 = vsel %vm31, %v119, 0.0
  %v124 = vadd.f32 %v122, %v123
  %v125 = vrot.slane %v124, 4
  %v126 = vadd.f32 %v124, %v125
  %v127 = vrot.slane %v126, 2
  %v128 = vadd.f32 %v126, %v127
  %v129 = vrot.slane %v128, 1
  %v130 = vadd.f32 %v128, %v129
  %v131 = vsel %vm31, %v120, 0.0
  %v132 = vsel %vm31, %v121, 0.0
  %v133 = vadd.f32 %v131, %v132
  %v134 = vrot.slane %v133, 4
  %v135 = vadd.f32 %v133, %v134
  %v136 = vrot.slane %v135, 2
  %v137 = vadd.f32 %v135, %v136
  %v138 = vrot.slane %v137, 1
  %v139 = vadd.f32 %v137, %v138
  %vm140 = vcmask 1040384
  %v141 = vsel %vm140, %v40, %v70
  %v142 = vsel %vm140, %v49, %v79
  %vm143 = vcmask 1041408
  %v144 = vsel %vm143, %v141, %v100
  %v145 = vsel %vm143, %v142, %v109
  %vm146 = vcmask 1042432
  %v147 = vsel %vm146, %v144, %v130
  %v148 = vsel %vm146, %v145, %v139
  %v149 = vld [vmem:[%s1 + $0x30] sm:$0xf]
  %151 = vset.pattern.permute.xlu0 0
  %152 = vperm.xlu0 %151, %v149
  %v153 = vpop.permute.xlu0 %152
  %v155 = vadd.f32 %v147, %v153
  %v156 = vadd.f32 %v148, %v153
  %vm157 = vcmask 68608
  %v158 = vsel %vm157, %v155, 0.0
  %159 = vadd.xlane.f32.xlu0 %v158
  %v160 = vpop.xlane.xlu0 %159
  %v161 = vsel %vm157, %v156, 0.0
  %162 = vadd.xlane.f32.xlu0 %v161
  %v163 = vpop.xlane.xlu0 %162
  %vm164 = vcmask 1043456
  %v165 = vsel %vm164, %v160, 0.0
  %v166 = vsel %vm164, %v163, 0.0
  %v167 = vadd.f32 %v165, %v166
  %v168 = vmul.f32 %v167, 0.055555556
  %v169 = vsub.f32 %v155, %v168
  %v170 = vsub.f32 %v156, %v168
  %v171 = vmul.f32 %v169, %v169
  %v172 = vmul.f32 %v170, %v170
  %v173 = vsel %vm157, %v171, 0.0
  %174 = vadd.xlane.f32.xlu0 %v173
  %v175 = vpop.xlane.xlu0 %174
  %v176 = vsel %vm157, %v172, 0.0
  %177 = vadd.xlane.f32.xlu0 %v176
  %v178 = vpop.xlane.xlu0 %177
  %v179 = vsel %vm164, %v175, 0.0
  %v180 = vsel %vm164, %v178, 0.0
  %v181 = vadd.f32 %v179, %v180
  %v182 = vmul.f32 %v181, 0.055555556
  %v183 = vmax.f32 %v182, 0.0
  %v184 = vadd.f32 %v183, 1e-05
  %v185 = vrsqrt.pop %v184
  %v186 = vmul.f32 %v149, %v185
  %188 = vset.pattern.permute.xlu0 1
  %189 = vperm.xlu0 %188, %v186
  %v190 = vpop.permute.xlu0 %189
  %v192 = vmul.f32 %v169, %v190
  %v193 = vmul.f32 %v170, %v190
  %194 = vset.pattern.permute.xlu0 2
  %195 = vperm.xlu0 %194, %v149
  %v196 = vpop.permute.xlu0 %195
  %v198 = vadd.f32 %v192, %v196
  %v199 = vadd.f32 %v193, %v196
  %v200 = vmax.f32 %v198, 0.0
  %v201 = vmax.f32 %v199, 0.0
  %v202 = vld [vmem:[%s1 + $0x10] sm:$0xf]
  %v203 = vlaneseq
  %v204 = vshrl.u32 %v203, 7
  %v205 = vsub.s32 0, %v204
  %v206 = vrot.slane %v200, %v205
  %v207 = vlaneseq
  %v208 = vshrl.u32 %v207, 7
  %v209 = vsub.s32 0, %v208
  %v210 = vrot.slane %v201, %v209
  %v211 = vmul.f32 %v202, %v206
  %v212 = vmul.f32 %v202, %v210
  %v213 = vadd.f32 %v211, 0.0
  %v214 = vadd.f32 %v212, 0.0
  %v215 = vld [vmem:[%s1 + $0x14] sm:$0xf]
  %v216 = vlaneseq
  %v217 = vshrl.u32 %v216, 7
  %v218 = vsub.s32 1, %v217
  %v219 = vrot.slane %v200, %v218
  %v220 = vlaneseq
  %v221 = vshrl.u32 %v220, 7
  %v222 = vsub.s32 1, %v221
  %v223 = vrot.slane %v201, %v222
  %v224 = vmul.f32 %v215, %v219
  %v225 = vmul.f32 %v215, %v223
  %v226 = vadd.f32 %v213, %v224
  %v227 = vadd.f32 %v214, %v225
  %v228 = vld [vmem:[%s1 + $0x18] sm:$0xf]
  %v229 = vlaneseq
  %v230 = vshrl.u32 %v229, 7
  %v231 = vsub.s32 2, %v230
  %v232 = vrot.slane %v200, %v231
  %v233 = vlaneseq
  %v234 = vshrl.u32 %v233, 7
  %v235 = vsub.s32 2, %v234
  %v236 = vrot.slane %v201, %v235
  %v237 = vmul.f32 %v228, %v232
  %v238 = vmul.f32 %v228, %v236
  %v239 = vadd.f32 %v226, %v237
  %v240 = vadd.f32 %v227, %v238
  %v241 = vld [vmem:[%s1 + $0x1c] sm:$0xf]
  %v242 = vlaneseq
  %v243 = vshrl.u32 %v242, 7
  %v244 = vsub.s32 3, %v243
  %v245 = vrot.slane %v200, %v244
  %v246 = vlaneseq
  %v247 = vshrl.u32 %v246, 7
  %v248 = vsub.s32 3, %v247
  %v249 = vrot.slane %v201, %v248
  %v250 = vmul.f32 %v241, %v245
  %v251 = vmul.f32 %v241, %v249
  %v252 = vadd.f32 %v239, %v250
  %v253 = vadd.f32 %v240, %v251
  %v254 = vsel %vm157, %v252, 0.0
  %255 = vadd.xlane.f32.xlu0 %v254
  %v256 = vpop.xlane.xlu0 %255
  %v257 = vsel %vm157, %v253, 0.0
  %258 = vadd.xlane.f32.xlu0 %v257
  %v259 = vpop.xlane.xlu0 %258
  %v260 = vadd.f32 %v256, %v149
  %v261 = vadd.f32 %v259, %v149
  %v262 = vadd.f32 %v260, 0.0
  %v263 = vadd.f32 %v261, 0.0
  %vm264 = vcmask 27672
  %v265 = vsel %vm264, %v262, 0.0
  %v266 = vsel %vm264, %v263, 0.0
  %v267 = vadd.f32 %v265, %v266
  %v268 = vmul.f32 %v267, 0.5
  %v269 = vsub.f32 %v260, %v268
  %v270 = vsub.f32 %v261, %v268
  %v271 = vmul.f32 %v269, %v269
  %v272 = vmul.f32 %v270, %v270
  %v273 = vadd.f32 %v271, 0.0
  %v274 = vadd.f32 %v272, 0.0
  %v275 = vsel %vm264, %v273, 0.0
  %v276 = vsel %vm264, %v274, 0.0
  %v277 = vadd.f32 %v275, %v276
  %v278 = vmul.f32 %v277, 0.5
  %v279 = vmax.f32 %v278, 0.0
  %v280 = vadd.f32 %v279, 1e-05
  %v281 = vrsqrt.pop %v280
  %283 = vrot.lane.b32.xlu0 %v281, 1
  %v284 = vpop.permute.xlu0 %283
  %v286 = vmul.f32 %v149, %v284
  %288 = vrot.lane.b32.xlu0 %v286, 127
  %v289 = vpop.permute.xlu0 %288
  %v291 = vmul.f32 %v269, %v289
  %v292 = vmul.f32 %v270, %v289
  %293 = vrot.lane.b32.xlu0 %v149, 126
  %v294 = vpop.permute.xlu0 %293
  %v296 = vadd.f32 %v291, %v294
  %v297 = vadd.f32 %v292, %v294
  %v298 = vmax.f32 %v296, 0.0
  %v299 = vmax.f32 %v297, 0.0
  %v300 = vadd.f32 %v298, 0.0
  %v301 = vadd.f32 %v299, 0.0
  %v302 = vsel %vm264, %v300, 0.0
  %v303 = vsel %vm264, %v301, 0.0
  %v304 = vadd.f32 %v302, %v303
  %v305 = vmul.f32 %v304, 0.5
  %v306 = vsub.f32 %v298, %v305
  %v307 = vsub.f32 %v299, %v305
  %v308 = vmul.f32 %v306, %v306
  %v309 = vmul.f32 %v307, %v307
  %v310 = vadd.f32 %v308, 0.0
  %v311 = vadd.f32 %v309, 0.0
  %v312 = vsel %vm264, %v310, 0.0
  %v313 = vsel %vm264, %v311, 0.0
  %v314 = vadd.f32 %v312, %v313
  %v315 = vmul.f32 %v314, 0.5
  %v316 = vmax.f32 %v315, 0.0
  %v317 = vadd.f32 %v316, 1e-05
  %v318 = vrsqrt.pop %v317
  %320 = vrot.lane.b32.xlu0 %v318, 3
  %v321 = vpop.permute.xlu0 %320
  %v323 = vmul.f32 %v149, %v321
  %325 = vrot.lane.b32.xlu0 %v323, 125
  %v326 = vpop.permute.xlu0 %325
  %v328 = vmul.f32 %v306, %v326
  %v329 = vmul.f32 %v307, %v326
  %330 = vrot.lane.b32.xlu0 %v149, 124
  %v331 = vpop.permute.xlu0 %330
  %v333 = vadd.f32 %v328, %v331
  %v334 = vadd.f32 %v329, %v331
  %v335 = vld [vmem:[%s1 + $0x20] sm:$0xff]
  %v336 = vld [vmem:[%s1 + $0x28] sm:$0xff]
  %v337 = vlaneseq
  %v338 = vshrl.u32 %v337, 7
  %v339 = vsub.s32 0, %v338
  %v340 = vrot.slane %v333, %v339
  %v341 = vlaneseq
  %v342 = vshrl.u32 %v341, 7
  %v343 = vsub.s32 0, %v342
  %v344 = vrot.slane %v334, %v343
  %347 = vrot.lane.b32.xlu0 %v340, 125
  %v348 = vpop.permute.xlu0 %347
  %349 = vrot.lane.b32.xlu0 %v344, 125
  %v350 = vpop.permute.xlu0 %349
  %v353 = vmul.f32 %v335, %v348
  %v354 = vmul.f32 %v336, %v348
  %v355 = vmul.f32 %v335, %v350
  %v356 = vmul.f32 %v336, %v350
  %v357 = vadd.f32 %v353, 0.0
  %v358 = vadd.f32 %v354, 0.0
  %v359 = vadd.f32 %v355, 0.0
  %v360 = vadd.f32 %v356, 0.0
  %v361 = vlaneseq
  %v362 = vshrl.u32 %v361, 7
  %v363 = vsub.s32 1, %v362
  %v364 = vrot.slane %v333, %v363
  %v365 = vlaneseq
  %v366 = vshrl.u32 %v365, 7
  %v367 = vsub.s32 1, %v366
  %v368 = vrot.slane %v334, %v367
  %371 = vrot.lane.b32.xlu0 %v364, 126
  %v372 = vpop.permute.xlu0 %371
  %373 = vrot.lane.b32.xlu0 %v368, 126
  %v374 = vpop.permute.xlu0 %373
  %v377 = vmul.f32 %v335, %v372
  %v378 = vmul.f32 %v336, %v372
  %v379 = vmul.f32 %v335, %v374
  %v380 = vmul.f32 %v336, %v374
  %385 = vrot.lane.b32.xlu0 %v377, 127
  %v386 = vpop.permute.xlu0 %385
  %387 = vrot.lane.b32.xlu0 %v378, 127
  %v388 = vpop.permute.xlu0 %387
  %389 = vrot.lane.b32.xlu0 %v379, 127
  %v390 = vpop.permute.xlu0 %389
  %391 = vrot.lane.b32.xlu0 %v380, 127
  %v392 = vpop.permute.xlu0 %391
  %v397 = vadd.f32 %v357, %v386
  %v398 = vadd.f32 %v358, %v388
  %v399 = vadd.f32 %v359, %v390
  %v400 = vadd.f32 %v360, %v392
  %v401 = vlaneseq
  %v402 = vshrl.u32 %v401, 7
  %v403 = vsub.s32 2, %v402
  %v404 = vrot.slane %v333, %v403
  %v405 = vlaneseq
  %v406 = vshrl.u32 %v405, 7
  %v407 = vsub.s32 2, %v406
  %v408 = vrot.slane %v334, %v407
  %411 = vrot.lane.b32.xlu0 %v404, 127
  %v412 = vpop.permute.xlu0 %411
  %413 = vrot.lane.b32.xlu0 %v408, 127
  %v414 = vpop.permute.xlu0 %413
  %v417 = vmul.f32 %v335, %v412
  %v418 = vmul.f32 %v336, %v412
  %v419 = vmul.f32 %v335, %v414
  %v420 = vmul.f32 %v336, %v414
  %425 = vrot.lane.b32.xlu0 %v417, 126
  %v426 = vpop.permute.xlu0 %425
  %427 = vrot.lane.b32.xlu0 %v418, 126
  %v428 = vpop.permute.xlu0 %427
  %429 = vrot.lane.b32.xlu0 %v419, 126
  %v430 = vpop.permute.xlu0 %429
  %431 = vrot.lane.b32.xlu0 %v420, 126
  %v432 = vpop.permute.xlu0 %431
  %v437 = vadd.f32 %v397, %v426
  %v438 = vadd.f32 %v398, %v428
  %v439 = vadd.f32 %v399, %v430
  %v440 = vadd.f32 %v400, %v432
  %v441 = vlaneseq
  %v442 = vshrl.u32 %v441, 7
  %v443 = vsub.s32 3, %v442
  %v444 = vrot.slane %v333, %v443
  %v445 = vlaneseq
  %v446 = vshrl.u32 %v445, 7
  %v447 = vsub.s32 3, %v446
  %v448 = vrot.slane %v334, %v447
  %v449 = vmul.f32 %v335, %v444
  %v450 = vmul.f32 %v336, %v444
  %v451 = vmul.f32 %v335, %v448
  %v452 = vmul.f32 %v336, %v448
  %457 = vrot.lane.b32.xlu0 %v449, 125
  %v458 = vpop.permute.xlu0 %457
  %459 = vrot.lane.b32.xlu0 %v450, 125
  %v460 = vpop.permute.xlu0 %459
  %461 = vrot.lane.b32.xlu0 %v451, 125
  %v462 = vpop.permute.xlu0 %461
  %463 = vrot.lane.b32.xlu0 %v452, 125
  %v464 = vpop.permute.xlu0 %463
  %v469 = vadd.f32 %v437, %v458
  %v470 = vadd.f32 %v438, %v460
  %v471 = vadd.f32 %v439, %v462
  %v472 = vadd.f32 %v440, %v464
  %v473 = vld [vmem:[%s1 + $0x38] sm:$0xff]
  %v474 = vld [vmem:[%s1 + $0x40] sm:$0xff]
  %v475 = vadd.f32 %v469, %v473
  %v476 = vadd.f32 %v470, %v474
  %v477 = vadd.f32 %v471, %v473
  %v478 = vadd.f32 %v472, %v474
  %480 = vset.pattern.permute.xlu0 0
  %481 = vperm.xlu0 %480, %v475
  %v482 = vpop.permute.xlu0 %481
  %485 = vset.pattern.permute.xlu0 0
  %486 = vperm.xlu0 %485, %v476
  %v487 = vpop.permute.xlu0 %486
  %490 = vset.pattern.permute.xlu0 0
  %491 = vperm.xlu0 %490, %v477
  %v492 = vpop.permute.xlu0 %491
  %495 = vset.pattern.permute.xlu0 0
  %496 = vperm.xlu0 %495, %v478
  %v497 = vpop.permute.xlu0 %496
  %v499 = vadd.f32 %v11, %v482
  %v500 = vadd.f32 %v12, %v487
  %v501 = vadd.f32 %v13, %v492
  %v502 = vadd.f32 %v14, %v497
  %v503 = vmax.f32 %v499, 0.0
  %v504 = vmax.f32 %v500, 0.0
  %v505 = vmax.f32 %v501, 0.0
  %v506 = vmax.f32 %v502, 0.0
  %507 = vst.msk [vmem:[%s2] sm:$0xff] %vm31, %v503
  %508 = vst.msk [vmem:[%s2 + $0x8] sm:$0xff] %vm31, %v504
  %509 = vst.msk [vmem:[%s2 + $0x10] sm:$0xff] %vm31, %v505
  %510 = vst.msk [vmem:[%s2 + $0x18] sm:$0xff] %vm31, %v506
  // Predicated region
  $region10: #{bottleneck_block.1} parent=0 // pred_check
    _
  $region11: #{bottleneck_block.1} parent=0 // pred_check_branch
    %512 = sbr.rel (0) target = $region13
  $region12: #{bottleneck_block.1} parent=0 // pred_region
    _
  $region13: #{bottleneck_block.1} parent=0 // pred_fallthru
    _
  // Predicated region
  $region14: #{bottleneck_block.1} parent=0 // pred_check
    _
  $region15: #{bottleneck_block.1} parent=0 // pred_check_branch
    %514 = sbr.rel (0) target = $region17
  $region16: #{bottleneck_block.1} parent=0 // pred_region
    _
  $region17: #{bottleneck_block.1} parent=0 // pred_fallthru
    _

</llo_original>
